<compile_context>
chip_gen: v5e
topology: v5e:2x2
jax: 0.10.0
libtpu: 0.0.40
codegen_flags: <defaults>
</compile_context>

<pallas_src>
import math

import jax
import jax.numpy as jnp
from jax.experimental import pallas as pl
from jax.experimental.pallas import tpu as pltpu


_COEF_ORDER = ("p0", "p1", "p2", "p3", "p4", "p5", "q1", "q2", "q3", "q4")


def _round_up(x, m):
    return ((x + m - 1) // m) * m


def _cdiv(a, b):
    return -(-a // b)


def lra_kernel(x_ref, coef_ref, o_ref):
    # x_ref:    (row_tile, lane) input tile
    # coef_ref: (10, lane) f32 coefficient table, rows = [p0..p5, q1..q4]
    # o_ref:    (row_tile, lane) output tile (same dtype as input)
    x = x_ref[...].astype(jnp.float32)

    coef = coef_ref[...]              # one (10, lane) load; slice in-register
    p0 = coef[0:1, :]
    p1 = coef[1:2, :]
    p2 = coef[2:3, :]
    p3 = coef[3:4, :]
    p4 = coef[4:5, :]
    p5 = coef[5:6, :]
    q1 = coef[6:7, :]
    q2 = coef[7:8, :]
    q3 = coef[8:9, :]
    q4 = coef[9:10, :]

    # Horner form: fewer VALU ops than carrying explicit powers of x.
    p = p0 + x * (p1 + x * (p2 + x * (p3 + x * (p4 + x * p5))))
    q = x * (q1 + x * (q2 + x * (q3 + x * q4)))

    d = jnp.abs(q) + 1.0
    # EUP approximate reciprocal + one Newton-Raphson refinement step:
    # ~f32 accuracy without an f32 divide; extra VALU ops are hidden under the
    # HBM-bound roofline.
    inv = pl.reciprocal(d, approx=True)
    inv = inv * (2.0 - d * inv)
    o_ref[...] = (p * inv).astype(o_ref.dtype)


def _default_tile_bytes():
    """Chip-aware tile byte budget (double-buffered in+out ~= 4x this)."""
    try:
        vmem = pltpu.get_tpu_info().vmem_capacity_bytes
    except Exception:  # non-TPU backend / interpret mode
        vmem = 64 << 20
    # v5e/v6e (128 MiB) -> 3 MiB tiles; v7x (64 MiB) -> 2 MiB tiles.
    # 4 * tile stays well inside every generation's default scoped-VMEM limit
    # (v5e 16 MiB), so no vmem_limit_bytes override is required.
    return max(1 << 20, min(3 << 20, vmem // 32))


def _pick_row_tile(rows, lane, itemsize, max_tile_bytes):
    """Largest sublane-aligned row tile within the byte budget, with >=8 steps."""
    sub = 8 if itemsize >= 4 else 16          # sublane packing for bf16/fp8
    bytes_per_row = lane * itemsize
    rt = max(sub, (max(1, max_tile_bytes // bytes_per_row) // sub) * sub)
    rt = min(rt, rows)                        # rows is already a multiple of sub
    rt = max(sub, rt)
    # Aim for >= 8 grid steps (>= 4 per TensorCore on v7x megacore) when there
    # is enough data, so the DMA pipeline overlaps compute on both cores.
    target_steps = 8
    if rows >= target_steps * sub and _cdiv(rows, rt) < target_steps:
        rt = max(sub, _round_up(_cdiv(rows, target_steps), sub))
    return rt


def lra_forward(x, coeffs, group_size, *, max_tile_bytes=None):
    """x: (B, T, C); coeffs: dict of 10 arrays, each (1, group_size)."""
    B, T, C = x.shape
    assert C % group_size == 0
    n_total = B * T * C
    if max_tile_bytes is None:
        max_tile_bytes = _default_tile_bytes()

    itemsize = jnp.dtype(x.dtype).itemsize
    sub = 8 if itemsize >= 4 else 16

    # Lane-dense layout for every group_size: lane is a multiple of 128
    # (unmasked vst, full vreg lanes) and a multiple of group_size (the
    # repeating coefficient pattern stays aligned at the start of every row).
    lane = group_size * 128 // math.gcd(group_size, 128)
    reps = lane // group_size
    coef_table = jnp.stack(
        [jnp.tile(coeffs[k].reshape(group_size).astype(jnp.float32), reps)
         for k in _COEF_ORDER],
        axis=0,
    )  # (10, lane)

    # Pad only up to a multiple of (sub * lane) — never to a multiple of the
    # row tile — so the full-tensor pad/slice copies disappear for well-shaped
    # inputs. Partial final *tiles* are masked by Pallas.
    rows = _round_up(_cdiv(n_total, lane), sub)
    padded_total = rows * lane
    flat = x.reshape(-1)
    pad = padded_total - n_total
    if pad:
        flat = jnp.pad(flat, (0, pad))
    x2d = flat.reshape(rows, lane)

    row_tile = _pick_row_tile(rows, lane, itemsize, max_tile_bytes)
    grid = _cdiv(rows, row_tile)

    out2d = pl.pallas_call(
        lra_kernel,
        out_shape=jax.ShapeDtypeStruct((rows, lane), x.dtype),
        grid_spec=pltpu.PrefetchScalarGridSpec(
            num_scalar_prefetch=0,
            grid=(grid,),
            in_specs=[
                pl.BlockSpec((row_tile, lane), lambda i: (i, 0)),
                pl.BlockSpec((10, lane), lambda i: (0, 0)),
            ],
            out_specs=pl.BlockSpec((row_tile, lane), lambda i: (i, 0)),
        ),
        compiler_params=pltpu.CompilerParams(
            dimension_semantics=("parallel",),
        ),
    )(x2d, coef_table)

    out_flat = out2d.reshape(-1)
    if pad:
        out_flat = out_flat[:n_total]
    return out_flat.reshape(B, T, C)


def _init_coeffs(key, group_size):
    """Deterministic stand-in for torch.nn.init.trunc_normal_(std=0.02)."""
    keys = jax.random.split(key, len(_COEF_ORDER))
    coeffs = {}
    for name, k in zip(_COEF_ORDER, keys):
        coeffs[name] = (
            jax.random.truncated_normal(k, -2.0, 2.0, (1, group_size), jnp.float32)
            * 0.02
        )
    return coeffs


def _reference(x, coeffs, group_size):
    """Pure-JAX reference mirroring the PyTorch forward exactly."""
    B, T, C = x.shape
    num_groups = C // group_size
    flat_x = x.reshape(-1)
    p = jnp.broadcast_to(coeffs["p0"], (B * T * num_groups, group_size))
    xp = flat_x
    p = p + coeffs["p1"] * xp.reshape(-1, group_size)
    q = coeffs["q1"] * xp.reshape(-1, group_size)
    xp = xp * flat_x
    p = p + coeffs["p2"] * xp.reshape(-1, group_size)
    q = q + coeffs["q2"] * xp.reshape(-1, group_size)
    xp = xp * flat_x
    p = p + coeffs["p3"] * xp.reshape(-1, group_size)
    q = q + coeffs["q3"] * xp.reshape(-1, group_size)
    xp = xp * flat_x
    p = p + coeffs["p4"] * xp.reshape(-1, group_size)
    q = q + coeffs["q4"] * xp.reshape(-1, group_size)
    xp = xp * flat_x
    p = p + coeffs["p5"] * xp.reshape(-1, group_size)
    return (p / (jnp.abs(q) + 1.0)).reshape(B, T, C)


if __name__ == "__main__":
    key = jax.random.PRNGKey(0)
    k_x1, k_x2, k_x3, k_c1, k_c2 = jax.random.split(key, 5)

    # Case 1: canonical small shape (lane = 128, total divisible by lane).
    B, T, C = 2, 8, 32
    group_size = 8
    coeffs = _init_coeffs(k_c1, group_size)
    x1 = jax.random.normal(k_x1, (B, T, C), dtype=jnp.float32)
    out1 = jax.block_until_ready(lra_forward(x1, coeffs, group_size))
    ref1 = _reference(x1, coeffs, group_size)
    assert out1.shape == (B, T, C)
    assert jnp.allclose(out1, ref1, atol=1e-3, rtol=1e-3), "case1 mismatch vs reference"

    # Case 2: total elements not a multiple of lane -> exercises the padded tail.
    B2, T2, C2 = 3, 7, 24
    x2 = jax.random.normal(k_x2, (B2, T2, C2), dtype=jnp.float32)
    out2 = jax.block_until_ready(lra_forward(x2, coeffs, group_size))
    ref2 = _reference(x2, coeffs, group_size)
    assert out2.shape == (B2, T2, C2)
    assert jnp.allclose(out2, ref2, atol=1e-3, rtol=1e-3), "case2 mismatch vs reference"

    # Case 3: group_size that does not divide 128 -> lane = lcm(12, 128) = 384.
    B3, T3, C3 = 2, 8, 36
    group_size3 = 12
    coeffs3 = _init_coeffs(k_c2, group_size3)
    x3 = jax.random.normal(k_x3, (B3, T3, C3), dtype=jnp.float32)
    out3 = jax.block_until_ready(lra_forward(x3, coeffs3, group_size3))
    ref3 = _reference(x3, coeffs3, group_size3)
    assert out3.shape == (B3, T3, C3)
    assert jnp.allclose(out3, ref3, atol=1e-3, rtol=1e-3), "case3 mismatch vs reference"

    print("KERNEL_OK")
</pallas_src>

<mosaic_0001>
module attributes {stable_mosaic.version = 11 : i64} {
  func.func @lra_kernel(%arg0: i32, %arg1: memref<8x128xf32, #tpu.memory_space<vmem>>, %arg2: memref<10x128xf32, #tpu.memory_space<vmem>>, %arg3: memref<8x128xf32, #tpu.memory_space<vmem>>) attributes {dimension_semantics = [#tpu.dimension_semantics<parallel>], iteration_bounds = array<i64: 1>, scalar_prefetch = 0 : i64, scratch_operands = 0 : i64, tpu.core_type = #tpu.core_type<tc>, window_params = [{transform_indices = @transform_0, window_bounds = array<i64: 8, 128>}, {pipeline_mode = #tpu.pipeline_mode<synchronous>, transform_indices = @transform_1, window_bounds = array<i64: 10, 128>}, {transform_indices = @transform_2, window_bounds = array<i64: 8, 128>}]} {
    %c0 = arith.constant 0 : index
    %c0_0 = arith.constant 0 : index
    %0 = vector.load %arg1[%c0, %c0_0] : memref<8x128xf32, #tpu.memory_space<vmem>>, vector<8x128xf32>
    %c0_1 = arith.constant 0 : index
    %c0_2 = arith.constant 0 : index
    %1 = vector.load %arg2[%c0_1, %c0_2] : memref<10x128xf32, #tpu.memory_space<vmem>>, vector<10x128xf32>
    %2 = vector.extract_strided_slice %1 {offsets = [0, 0], sizes = [1, 128], strides = [1, 1]} : vector<10x128xf32> to vector<1x128xf32>
    %3 = vector.extract_strided_slice %1 {offsets = [1, 0], sizes = [1, 128], strides = [1, 1]} : vector<10x128xf32> to vector<1x128xf32>
    %4 = vector.extract_strided_slice %1 {offsets = [2, 0], sizes = [1, 128], strides = [1, 1]} : vector<10x128xf32> to vector<1x128xf32>
    %5 = vector.extract_strided_slice %1 {offsets = [3, 0], sizes = [1, 128], strides = [1, 1]} : vector<10x128xf32> to vector<1x128xf32>
    %6 = vector.extract_strided_slice %1 {offsets = [4, 0], sizes = [1, 128], strides = [1, 1]} : vector<10x128xf32> to vector<1x128xf32>
    %7 = vector.extract_strided_slice %1 {offsets = [5, 0], sizes = [1, 128], strides = [1, 1]} : vector<10x128xf32> to vector<1x128xf32>
    %8 = vector.extract_strided_slice %1 {offsets = [6, 0], sizes = [1, 128], strides = [1, 1]} : vector<10x128xf32> to vector<1x128xf32>
    %9 = vector.extract_strided_slice %1 {offsets = [7, 0], sizes = [1, 128], strides = [1, 1]} : vector<10x128xf32> to vector<1x128xf32>
    %10 = vector.extract_strided_slice %1 {offsets = [8, 0], sizes = [1, 128], strides = [1, 1]} : vector<10x128xf32> to vector<1x128xf32>
    %11 = vector.extract_strided_slice %1 {offsets = [9, 0], sizes = [1, 128], strides = [1, 1]} : vector<10x128xf32> to vector<1x128xf32>
    %12 = vector.broadcast %7 : vector<1x128xf32> to vector<8x128xf32>
    %13 = arith.mulf %0, %12 : vector<8x128xf32>
    %14 = vector.broadcast %6 : vector<1x128xf32> to vector<8x128xf32>
    %15 = arith.addf %14, %13 : vector<8x128xf32>
    %16 = arith.mulf %0, %15 : vector<8x128xf32>
    %17 = vector.broadcast %5 : vector<1x128xf32> to vector<8x128xf32>
    %18 = arith.addf %17, %16 : vector<8x128xf32>
    %19 = arith.mulf %0, %18 : vector<8x128xf32>
    %20 = vector.broadcast %4 : vector<1x128xf32> to vector<8x128xf32>
    %21 = arith.addf %20, %19 : vector<8x128xf32>
    %22 = arith.mulf %0, %21 : vector<8x128xf32>
    %23 = vector.broadcast %3 : vector<1x128xf32> to vector<8x128xf32>
    %24 = arith.addf %23, %22 : vector<8x128xf32>
    %25 = arith.mulf %0, %24 : vector<8x128xf32>
    %26 = vector.broadcast %2 : vector<1x128xf32> to vector<8x128xf32>
    %27 = arith.addf %26, %25 : vector<8x128xf32>
    %28 = vector.broadcast %11 : vector<1x128xf32> to vector<8x128xf32>
    %29 = arith.mulf %0, %28 : vector<8x128xf32>
    %30 = vector.broadcast %10 : vector<1x128xf32> to vector<8x128xf32>
    %31 = arith.addf %30, %29 : vector<8x128xf32>
    %32 = arith.mulf %0, %31 : vector<8x128xf32>
    %33 = vector.broadcast %9 : vector<1x128xf32> to vector<8x128xf32>
    %34 = arith.addf %33, %32 : vector<8x128xf32>
    %35 = arith.mulf %0, %34 : vector<8x128xf32>
    %36 = vector.broadcast %8 : vector<1x128xf32> to vector<8x128xf32>
    %37 = arith.addf %36, %35 : vector<8x128xf32>
    %38 = arith.mulf %0, %37 : vector<8x128xf32>
    %39 = math.absf %38 : vector<8x128xf32>
    %cst = arith.constant 1.000000e+00 : f32
    %40 = vector.broadcast %cst : f32 to vector<8x128xf32>
    %41 = arith.addf %39, %40 : vector<8x128xf32>
    %42 = tpu.reciprocal %41 {approx = true} : vector<8x128xf32> -> vector<8x128xf32>
    %43 = arith.mulf %41, %42 : vector<8x128xf32>
    %cst_3 = arith.constant 2.000000e+00 : f32
    %44 = vector.broadcast %cst_3 : f32 to vector<8x128xf32>
    %45 = arith.subf %44, %43 : vector<8x128xf32>
    %46 = arith.mulf %42, %45 : vector<8x128xf32>
    %47 = arith.mulf %27, %46 : vector<8x128xf32>
    %c0_4 = arith.constant 0 : index
    %c0_5 = arith.constant 0 : index
    %48 = vector.load %arg3[%c0_4, %c0_5] : memref<8x128xf32, #tpu.memory_space<vmem>>, vector<8x128xf32>
    tpu.vector_store %arg3[%c0_4, %c0_5], %47 {strides = array<i32>} : memref<8x128xf32, #tpu.memory_space<vmem>>, vector<8x128xf32>,
    return
  }
  func.func @transform_0(%arg0: i32) -> (i32, i32) {
    %c0_i32 = arith.constant 0 : i32
    %c0_i32_0 = arith.constant 0 : i32
    return %arg0, %c0_i32 : i32, i32
  }
  func.func @transform_1(%arg0: i32) -> (i32, i32) {
    %c0_i32 = arith.constant 0 : i32
    %c0_i32_0 = arith.constant 0 : i32
    %c0_i32_1 = arith.constant 0 : i32
    return %c0_i32, %c0_i32_0 : i32, i32
  }
  func.func @transform_2(%arg0: i32) -> (i32, i32) {
    %c0_i32 = arith.constant 0 : i32
    %c0_i32_0 = arith.constant 0 : i32
    return %arg0, %c0_i32 : i32, i32
  }
}

</mosaic_0001>

<llo_original>
// kernel: tpu_custom_call.1
$region0: #{tpu_custom_call.1}
  #allocation0 [shape = 'u32[]', space=smem, size = 0x4, offset = 0x4, fixed_abs, tag = 'smem constant byte address 0x4 - core index']
  #allocation1 [shape = 'u32[72,128]{1,0:T(1,128)}', space=vmem, size = 0x9000, scoped, tag = 'internal scratch']
  %s0 = inlined_call_operand.hbm [shape: f32[8,128], index: 0, kind: input, shape index: {}]
  %s1 = inlined_call_operand.hbm [shape: f32[10,128], index: 1, kind: input, shape index: {}]
  %s2 = inlined_call_operand.hbm [shape: f32[8,128], index: 2, kind: output, shape index: {}]
  %s3 = sld [smem:[#allocation0]]
  $region26: #{tpu_custom_call.1} parent=0
    _
  %s5 = ssub.s32 1, %s3
  %s6 = scalar_select 0, %s5, %s3
  $region1: #{tpu_custom_call.1} parent=0
    #allocation2 [shape = 'u8[4096]{0}', space=vmem, size = 0x1000, scoped, tag = 'input window, operand 0, single buffered']
    #allocation3 [shape = 's32[1]{0}', space=sflag, size = 0x4, scoped, tag = 'scoped memory for tpu_custom_call.1']
    #allocation4 [shape = 's32[1]{0}', space=sflag, size = 0x4, scoped, tag = 'scoped memory for tpu_custom_call.1']
    #allocation5 [shape = 'u8[8192]{0}', space=vmem, size = 0x2000, scoped, tag = 'input window, operand 1, single buffered']
    #allocation6 [shape = 's32[1]{0}', space=sflag, size = 0x4, scoped, tag = 'scoped memory for tpu_custom_call.1']
    #allocation7 [shape = 'u8[4096]{0}', space=vmem, size = 0x1000, scoped, tag = 'output window, operand 0, single buffered']
    %7 = vsyncpa [#allocation3], 0
    %8 = vsyncpa [#allocation6], 0
    %9 = vsyncpa [#allocation4], 0
    // Predicated region
    $region2: #{tpu_custom_call.1} parent=1 // pred_check
      _
    $region3: #{tpu_custom_call.1} parent=1 // pred_check_branch
      %11 = sbr.rel (0) target = $region5
    $region4: #{tpu_custom_call.1} parent=1 // pred_region
      %13 = vsyncadd [#allocation3], 0
      %s15 = sshll.u32 %s0, 4
      %s16 = int_to_ptr.hbm [resolvable:$true] %s15
      %s17 = sshll.u32 [#allocation2], 4
      %s18 = int_to_ptr.vmem [resolvable:$true] %s17
      %20 = dma.hbm_to_vmem [thread:$0]  %s16, 128, %s18, [#allocation3]
    $region5: #{tpu_custom_call.1} parent=1 // pred_fallthru
      _
    // Predicated region
    $region6: #{tpu_custom_call.1} parent=1 // pred_check
      _
    $region7: #{tpu_custom_call.1} parent=1 // pred_check_branch
      %22 = sbr.rel (0) target = $region9
    $region8: #{tpu_custom_call.1} parent=1 // pred_region
      %24 = vsyncadd [#allocation6], 0
      %s25 = sshll.u32 %s1, 4
      %s26 = int_to_ptr.hbm [resolvable:$true] %s25
      %s27 = sshll.u32 [#allocation5], 4
      %s28 = int_to_ptr.vmem [resolvable:$true] %s27
      %33 = dma.hbm_to_vmem [thread:$0]  %s26, 256, %s28, [#allocation6], 128, 128, 8
    $region9: #{tpu_custom_call.1} parent=1 // pred_fallthru
      _
    // Predicated region
    $region10: #{tpu_custom_call.1} parent=1 // pred_check
      _
    $region11: #{tpu_custom_call.1} parent=1 // pred_check_branch
      %35 = sbr.rel (0) target = $region13
    $region12: #{tpu_custom_call.1} parent=1 // pred_region
      %37 = dma.done [#allocation3], 128
    $region13: #{tpu_custom_call.1} parent=1 // pred_fallthru
      _
    // Predicated region
    $region14: #{tpu_custom_call.1} parent=1 // pred_check
      _
    $region15: #{tpu_custom_call.1} parent=1 // pred_check_branch
      %39 = sbr.rel (0) target = $region17
    $region16: #{tpu_custom_call.1} parent=1 // pred_region
      %41 = dma.done [#allocation6], 256
    $region17: #{tpu_custom_call.1} parent=1 // pred_fallthru
      _
    %v42 = vld [vmem:[#allocation2] sm:$0xff]
    %v43 = vld [vmem:[#allocation5] sm:$0xff]
    %v44 = vld [vmem:[#allocation5 + $0x8] sm:$0x3]
    %v45 = vperm.slane %v43, 5
    %v46 = vmul.f32 %v42, %v45
    %v47 = vperm.slane %v43, 4
    %v48 = vadd.f32 %v47, %v46
    %v49 = vmul.f32 %v42, %v48
    %v50 = vperm.slane %v43, 3
    %v51 = vadd.f32 %v50, %v49
    %v52 = vmul.f32 %v42, %v51
    %v53 = vperm.slane %v43, 2
    %v54 = vadd.f32 %v53, %v52
    %v55 = vmul.f32 %v42, %v54
    %v56 = vperm.slane %v43, 1
    %v57 = vadd.f32 %v56, %v55
    %v58 = vmul.f32 %v42, %v57
    %v59 = vperm.slane %v43, 0
    %v60 = vadd.f32 %v59, %v58
    %v61 = vperm.slane %v44, 1
    %v62 = vmul.f32 %v42, %v61
    %v63 = vperm.slane %v44, 0
    %v64 = vadd.f32 %v63, %v62
    %v65 = vmul.f32 %v42, %v64
    %v66 = vperm.slane %v43, 7
    %v67 = vadd.f32 %v66, %v65
    %v68 = vmul.f32 %v42, %v67
    %v69 = vperm.slane %v43, 6
    %v70 = vadd.f32 %v69, %v68
    %v71 = vmul.f32 %v42, %v70
    %v72 = vand.u32 2147483647, %v71
    %v73 = vadd.f32 %v72, 1.0
    %v74 = vrcp.pop %v73
    %v75 = vmul.f32 %v73, %v74
    %v76 = vsub.f32 2.0, %v75
    %v77 = vmul.f32 %v74, %v76
    %v78 = vmul.f32 %v60, %v77
    %79 = vst [vmem:[#allocation7] sm:$0xff] %v78
    // Predicated region
    $region18: #{tpu_custom_call.1} parent=1 // pred_check
      _
    $region19: #{tpu_custom_call.1} parent=1 // pred_check_branch
      %81 = sbr.rel (0) target = $region21
    $region20: #{tpu_custom_call.1} parent=1 // pred_region
      %83 = vsyncadd [#allocation4], 0
      %s85 = sshll.u32 [#allocation7], 4
      %s86 = int_to_ptr.vmem [resolvable:$true] %s85
      %s87 = sshll.u32 %s2, 4
      %s88 = int_to_ptr.hbm [resolvable:$true] %s87
      %90 = dma.vmem_to_hbm [thread:$0]  %s86, 128, %s88, [#allocation4]
    $region21: #{tpu_custom_call.1} parent=1 // pred_fallthru
      _
    // Predicated region
    $region22: #{tpu_custom_call.1} parent=1 // pred_check
      _
    $region23: #{tpu_custom_call.1} parent=1 // pred_check_branch
      %92 = sbr.rel (0) target = $region25
    $region24: #{tpu_custom_call.1} parent=1 // pred_region
      %94 = dma.done [#allocation4], 128
    $region25: #{tpu_custom_call.1} parent=1 // pred_fallthru
      _
    %95 = vsyncpa [#allocation3], 1
    %96 = vsyncpa [#allocation6], 1
    %97 = vsyncpa [#allocation4], 1

</llo_original>
